<compile_context>
chip_gen: v6e
topology: v6e:2x2x1
jax: 0.10.0
libtpu: 0.0.40
codegen_flags: <defaults>
</compile_context>

<pallas_src>
import functools

import jax
import jax.numpy as jnp
from jax import lax
from jax.experimental import pallas as pl
from jax.experimental.pallas import tpu as pltpu


def _round_up(x: int, m: int) -> int:
    return ((x + m - 1) // m) * m


def _make_classifier_kernel(temp: float):
    inv_temp = 1.0 / float(temp)

    def kernel(x_ref, w_ref, xn_ref, out_ref):
        # --- L2 normalization (VPU in f32, rsqrt on the EUP) -----------------
        x32 = x_ref[...].astype(jnp.float32)                    # (TB, inc)
        sq = jnp.sum(x32 * x32, axis=-1, keepdims=True)         # (TB, 1)
        # clamp(sq, 1e-24) == clamp(norm, 1e-12) for non-negative norms
        inv_norm = lax.rsqrt(jnp.maximum(sq, 1e-24))
        x_n32 = x32 * inv_norm
        xn_ref[...] = x_n32.astype(xn_ref.dtype)

        # --- logits: MXU matmul with contracted last dims (no w.T) ----------
        w = w_ref[...]                                          # (C_pad, inc)
        # keep bf16 operands for the MXU when inputs are bf16 (f32 accumulate)
        x_mm = x_n32 if w.dtype == jnp.float32 else x_n32.astype(w.dtype)
        logits = lax.dot_general(
            x_mm, w,
            dimension_numbers=(((1,), (1,)), ((), ())),
            preferred_element_type=jnp.float32)                 # (TB, C_pad)
        # fold 1/temp into the store epilogue (single pass over the tile)
        out_ref[...] = (logits * inv_temp).astype(out_ref.dtype)

    return kernel


@functools.partial(jax.jit, static_argnames=("temp", "tile_b"))
def classifier_shallow_forward(x, weight, *, temp: float = 0.05, tile_b: int = 512):
    """x: (B, inc), weight: (num_class, inc) -> (x_normalized, logits / temp)."""
    B, inc = x.shape
    num_class, inc_w = weight.shape
    assert inc == inc_w, "feature dims of x and weight must match"

    # Lane-dense logits: pad num_class up to a multiple of 128.
    c_pad = _round_up(max(num_class, 128), 128)
    # Batch tile: multiple of 8 sublanes, capped by tile_b; pad batch to tile.
    tb = _round_up(min(int(tile_b), _round_up(B, 8)), 8)
    b_pad = _round_up(B, tb)

    x_p = x if b_pad == B else jnp.pad(x, ((0, b_pad - B), (0, 0)))
    w_p = weight if c_pad == num_class else jnp.pad(
        weight, ((0, c_pad - num_class), (0, 0)))

    kernel = _make_classifier_kernel(temp)
    grid = (b_pad // tb,)

    # VMEM budget: double-buffered x / x_n / logits tiles + resident weight.
    itemsize = jnp.dtype(x.dtype).itemsize
    w_bytes = c_pad * inc * jnp.dtype(weight.dtype).itemsize
    pipe_bytes = 2 * (2 * tb * inc + tb * c_pad) * itemsize
    vmem_limit = min(int(1.25 * (pipe_bytes + 2 * w_bytes)) + (4 << 20), 64 << 20)

    xn_p, out_p = pl.pallas_call(
        kernel,
        out_shape=(
            jax.ShapeDtypeStruct((b_pad, inc), x.dtype),
            jax.ShapeDtypeStruct((b_pad, c_pad), x.dtype),
        ),
        grid_spec=pltpu.PrefetchScalarGridSpec(
            num_scalar_prefetch=0,
            grid=grid,
            in_specs=[
                pl.BlockSpec((tb, inc), lambda i: (i, 0)),        # streamed x
                pl.BlockSpec((c_pad, inc), lambda i: (0, 0)),     # resident weight
            ],
            out_specs=[
                pl.BlockSpec((tb, inc), lambda i: (i, 0)),        # x_n
                pl.BlockSpec((tb, c_pad), lambda i: (i, 0)),      # logits (lane-dense)
            ],
        ),
        compiler_params=pltpu.CompilerParams(
            dimension_semantics=("parallel",),   # batch tiles are independent
            vmem_limit_bytes=vmem_limit,
        ),
    )(x_p, w_p)

    # Strip batch / class padding.
    return xn_p[:B], out_p[:B, :num_class]


def _reference(x, weight, temp=0.05):
    x32 = x.astype(jnp.float32)
    norm = jnp.sqrt(jnp.sum(x32 * x32, axis=-1, keepdims=True))
    x_n = x32 / jnp.maximum(norm, 1e-12)
    out = (x_n @ weight.astype(jnp.float32).T) / temp
    return x_n.astype(x.dtype), out.astype(x.dtype)


if __name__ == "__main__":
    # Small shapes consistent with the module (inc features -> num_class logits).
    B, INC, NUM_CLASS = 16, 256, 64
    TEMP = 0.05

    key = jax.random.PRNGKey(0)
    kx, kw = jax.random.split(key)

    x = jax.random.normal(kx, (B, INC), dtype=jnp.float32)
    # Deterministic synthetic weight init (xavier-normal-like scale).
    std = (2.0 / (INC + NUM_CLASS)) ** 0.5
    weight = std * jax.random.normal(kw, (NUM_CLASS, INC), dtype=jnp.float32)

    x_n, x_out = classifier_shallow_forward(x, weight, temp=TEMP)
    x_n = jax.block_until_ready(x_n)
    x_out = jax.block_until_ready(x_out)

    # Sanity-check against a pure-JAX reference.
    x_n_ref, x_out_ref = _reference(x, weight, TEMP)
    assert x_n.shape == (B, INC) and x_out.shape == (B, NUM_CLASS)
    assert jnp.allclose(x_n, x_n_ref, atol=1e-5, rtol=1e-5)
    assert jnp.allclose(x_out, x_out_ref, atol=1e-4, rtol=1e-4)

    # TODO(synk): GradientReverse backward (scaled negated grad) is a training-
    # time autograd rule, not representable in this forward kernel.
    print("KERNEL_OK")
</pallas_src>

<mosaic_0001>
module attributes {stable_mosaic.version = 11 : i64} {
  func.func @kernel(%arg0: i32, %arg1: memref<16x256xf32, #tpu.memory_space<vmem>>, %arg2: memref<128x256xf32, #tpu.memory_space<vmem>>, %arg3: memref<16x256xf32, #tpu.memory_space<vmem>>, %arg4: memref<16x128xf32, #tpu.memory_space<vmem>>) attributes {dimension_semantics = [#tpu.dimension_semantics<parallel>], iteration_bounds = array<i64: 1>, scalar_prefetch = 0 : i64, scratch_operands = 0 : i64, tpu.core_type = #tpu.core_type<tc>, window_params = [{transform_indices = @transform_0, window_bounds = array<i64: 16, 256>}, {pipeline_mode = #tpu.pipeline_mode<synchronous>, transform_indices = @transform_1, window_bounds = array<i64: 128, 256>}, {transform_indices = @transform_2, window_bounds = array<i64: 16, 256>}, {transform_indices = @transform_3, window_bounds = array<i64: 16, 128>}]} {
    %c0 = arith.constant 0 : index
    %c0_0 = arith.constant 0 : index
    %0 = vector.load %arg1[%c0, %c0_0] : memref<16x256xf32, #tpu.memory_space<vmem>>, vector<16x256xf32>
    %1 = arith.mulf %0, %0 : vector<16x256xf32>
    %cst = arith.constant dense<0.000000e+00> : vector<16xf32>
    %2 = vector.multi_reduction <add>, %1, %cst [1] : vector<16x256xf32> to vector<16xf32>
    %3 = vector.shape_cast %2 : vector<16xf32> to vector<16x1xf32>
    %cst_1 = arith.constant 1.000000e-24 : f32
    %4 = vector.broadcast %cst_1 : f32 to vector<16x1xf32>
    %5 = arith.maximumf %3, %4 : vector<16x1xf32>
    %6 = math.rsqrt %5 : vector<16x1xf32>
    %7 = vector.broadcast %6 : vector<16x1xf32> to vector<16x256xf32>
    %8 = arith.mulf %0, %7 : vector<16x256xf32>
    %c0_2 = arith.constant 0 : index
    %c0_3 = arith.constant 0 : index
    %9 = vector.load %arg3[%c0_2, %c0_3] : memref<16x256xf32, #tpu.memory_space<vmem>>, vector<16x256xf32>
    tpu.vector_store %arg3[%c0_2, %c0_3], %8 {strides = array<i32>} : memref<16x256xf32, #tpu.memory_space<vmem>>, vector<16x256xf32>,
    %c0_4 = arith.constant 0 : index
    %c0_5 = arith.constant 0 : index
    %10 = vector.load %arg2[%c0_4, %c0_5] : memref<128x256xf32, #tpu.memory_space<vmem>>, vector<128x256xf32>
    %cst_6 = arith.constant dense<0.000000e+00> : vector<16x128xf32>
    %11 = tpu.matmul %8, %10, %cst_6 {dimension_numbers = #tpu.dot_dimension_numbers<[1], [1], [0], [0], [0, 0, 1, 0], [], []>} : vector<16x256xf32>, vector<128x256xf32>, vector<16x128xf32> -> vector<16x128xf32>
    %cst_7 = arith.constant 2.000000e+01 : f32
    %12 = vector.broadcast %cst_7 : f32 to vector<16x128xf32>
    %13 = arith.mulf %11, %12 : vector<16x128xf32>
    %c0_8 = arith.constant 0 : index
    %c0_9 = arith.constant 0 : index
    %14 = vector.load %arg4[%c0_8, %c0_9] : memref<16x128xf32, #tpu.memory_space<vmem>>, vector<16x128xf32>
    tpu.vector_store %arg4[%c0_8, %c0_9], %13 {strides = array<i32>} : memref<16x128xf32, #tpu.memory_space<vmem>>, vector<16x128xf32>,
    return
  }
  func.func @transform_0(%arg0: i32) -> (i32, i32) {
    %c0_i32 = arith.constant 0 : i32
    %c0_i32_0 = arith.constant 0 : i32
    return %arg0, %c0_i32 : i32, i32
  }
  func.func @transform_1(%arg0: i32) -> (i32, i32) {
    %c0_i32 = arith.constant 0 : i32
    %c0_i32_0 = arith.constant 0 : i32
    %c0_i32_1 = arith.constant 0 : i32
    return %c0_i32, %c0_i32_0 : i32, i32
  }
  func.func @transform_2(%arg0: i32) -> (i32, i32) {
    %c0_i32 = arith.constant 0 : i32
    %c0_i32_0 = arith.constant 0 : i32
    return %arg0, %c0_i32 : i32, i32
  }
  func.func @transform_3(%arg0: i32) -> (i32, i32) {
    %c0_i32 = arith.constant 0 : i32
    %c0_i32_0 = arith.constant 0 : i32
    return %arg0, %c0_i32 : i32, i32
  }
}

</mosaic_0001>

<llo_original>
// kernel: classifier_shallow_forward.1
$region0: #{classifier_shallow_forward.1}
  #allocation0 [shape = 'u32[]', space=smem, size = 0x4, offset = 0x4, fixed_abs, tag = 'smem constant byte address 0x4 - core index']
  #allocation1 [shape = 'u32[144,128]{1,0:T(1,128)}', space=vmem, size = 0x12000, scoped, tag = 'internal scratch']
  %s0 = inlined_call_operand.vmem [shape: f32[16,256], index: 0, kind: input, shape index: {}]
  %s1 = inlined_call_operand.vmem [shape: f32[128,256], index: 1, kind: input, shape index: {}]
  %s2 = inlined_call_operand.hbm [shape: f32[16,256], index: 2, kind: output, shape index: {0}]
  %s3 = inlined_call_operand.hbm [shape: f32[16,128], index: 3, kind: output, shape index: {1}]
  %4 = xla_tuple %s2, %s3
  %s5 = sld [smem:[#allocation0]]
  $region26: #{classifier_shallow_forward.1} parent=0
    _
  %s7 = ssub.s32 1, %s5
  %s8 = scalar_select 0, %s7, %s5
  $region1: #{classifier_shallow_forward.1} parent=0
    #allocation2 [shape = 'u8[16384]{0}', space=vmem, size = 0x4000, scoped, tag = 'output window, operand 0, single buffered']
    #allocation3 [shape = 's32[1]{0}', space=sflag, size = 0x4, scoped, tag = 'scoped memory for classifier_shallow_forward.1']
    #allocation4 [shape = 'u8[8192]{0}', space=vmem, size = 0x2000, scoped, tag = 'output window, operand 1, single buffered']
    #allocation5 [shape = 's32[1]{0}', space=sflag, size = 0x4, scoped, tag = 'scoped memory for classifier_shallow_forward.1']
    %9 = vsyncpa [#allocation3], 0
    %10 = vsyncpa [#allocation5], 0
    // Predicated region
    $region2: #{classifier_shallow_forward.1} parent=1 // pred_check
      _
    $region3: #{classifier_shallow_forward.1} parent=1 // pred_check_branch
      %12 = sbr.rel (0) target = $region5
    $region4: #{classifier_shallow_forward.1} parent=1 // pred_region
      _
    $region5: #{classifier_shallow_forward.1} parent=1 // pred_fallthru
      _
    // Predicated region
    $region6: #{classifier_shallow_forward.1} parent=1 // pred_check
      _
    $region7: #{classifier_shallow_forward.1} parent=1 // pred_check_branch
      %14 = sbr.rel (0) target = $region9
    $region8: #{classifier_shallow_forward.1} parent=1 // pred_region
      _
    $region9: #{classifier_shallow_forward.1} parent=1 // pred_fallthru
      _
    %v15 = vld [vmem:[%s0] sm:$0xff]
    %v16 = vld [vmem:[%s0 + $0x8] sm:$0xff]
    %v17 = vld [vmem:[%s0 + $0x10] sm:$0xff]
    %v18 = vld [vmem:[%s0 + $0x18] sm:$0xff]
    %v19 = vmul.f32 %v15, %v15
    %v20 = vmul.f32 %v16, %v16
    %v21 = vmul.f32 %v17, %v17
    %v22 = vmul.f32 %v18, %v18
    %v23 = vadd.f32 %v19, %v20
    %24 = vadd.xlane.f32.xlu0 %v23
    %v25 = vpop.xlane.xlu0 %24
    %v26 = vadd.f32 %v21, %v22
    %27 = vadd.xlane.f32.xlu0 %v26
    %v28 = vpop.xlane.xlu0 %27
    %v29 = vmax.f32 %v25, 1e-24
    %v30 = vmax.f32 %v28, 1e-24
    %v31 = vrsqrt.pop %v29
    %v32 = vrsqrt.pop %v30
    %v33 = vmul.f32 %v15, %v31
    %v34 = vmul.f32 %v16, %v31
    %v35 = vmul.f32 %v17, %v32
    %v36 = vmul.f32 %v18, %v32
    %37 = vst [vmem:[#allocation2] sm:$0xff] %v33
    %38 = vst [vmem:[#allocation2 + $0x8] sm:$0xff] %v34
    %39 = vst [vmem:[#allocation2 + $0x10] sm:$0xff] %v35
    %40 = vst [vmem:[#allocation2 + $0x18] sm:$0xff] %v36
    %v41 = vld [vmem:[%s1] sm:$0xff]
    %v42 = vld [vmem:[%s1 + $0x8] sm:$0xff]
    %v43 = vld [vmem:[%s1 + $0x10] sm:$0xff]
    %v44 = vld [vmem:[%s1 + $0x18] sm:$0xff]
    %v45 = vld [vmem:[%s1 + $0x20] sm:$0xff]
    %v46 = vld [vmem:[%s1 + $0x28] sm:$0xff]
    %v47 = vld [vmem:[%s1 + $0x30] sm:$0xff]
    %v48 = vld [vmem:[%s1 + $0x38] sm:$0xff]
    %v49 = vld [vmem:[%s1 + $0x40] sm:$0xff]
    %v50 = vld [vmem:[%s1 + $0x48] sm:$0xff]
    %v51 = vld [vmem:[%s1 + $0x50] sm:$0xff]
    %v52 = vld [vmem:[%s1 + $0x58] sm:$0xff]
    %v53 = vld [vmem:[%s1 + $0x60] sm:$0xff]
    %v54 = vld [vmem:[%s1 + $0x68] sm:$0xff]
    %v55 = vld [vmem:[%s1 + $0x70] sm:$0xff]
    %v56 = vld [vmem:[%s1 + $0x78] sm:$0xff]
    %v57 = vld [vmem:[%s1 + $0x80] sm:$0xff]
    %v58 = vld [vmem:[%s1 + $0x88] sm:$0xff]
    %v59 = vld [vmem:[%s1 + $0x90] sm:$0xff]
    %v60 = vld [vmem:[%s1 + $0x98] sm:$0xff]
    %v61 = vld [vmem:[%s1 + $0xa0] sm:$0xff]
    %v62 = vld [vmem:[%s1 + $0xa8] sm:$0xff]
    %v63 = vld [vmem:[%s1 + $0xb0] sm:$0xff]
    %v64 = vld [vmem:[%s1 + $0xb8] sm:$0xff]
    %v65 = vld [vmem:[%s1 + $0xc0] sm:$0xff]
    %v66 = vld [vmem:[%s1 + $0xc8] sm:$0xff]
    %v67 = vld [vmem:[%s1 + $0xd0] sm:$0xff]
    %v68 = vld [vmem:[%s1 + $0xd8] sm:$0xff]
    %v69 = vld [vmem:[%s1 + $0xe0] sm:$0xff]
    %v70 = vld [vmem:[%s1 + $0xe8] sm:$0xff]
    %v71 = vld [vmem:[%s1 + $0xf0] sm:$0xff]
    %v72 = vld [vmem:[%s1 + $0xf8] sm:$0xff]
    %73 = vmatprep.subr.mxu0 %v72
    %74 = vmatpush1.xpose.msra.mxu0 %v71
    %75 = vmatprep.subr.mxu0 %v70
    %76 = vmatpush1.xpose.msra.mxu0 %v69
    %77 = vmatprep.subr.mxu0 %v68
    %78 = vmatpush1.xpose.msra.mxu0 %v67
    %79 = vmatprep.subr.mxu0 %v66
    %80 = vmatpush1.xpose.msra.mxu0 %v65
    %81 = vmatprep.subr.mxu0 %v64
    %82 = vmatpush1.xpose.msra.mxu0 %v63
    %83 = vmatprep.subr.mxu0 %v62
    %84 = vmatpush1.xpose.msra.mxu0 %v61
    %85 = vmatprep.subr.mxu0 %v60
    %86 = vmatpush1.xpose.msra.mxu0 %v59
    %87 = vmatprep.subr.mxu0 %v58
    %88 = vmatpush1.xpose.msra.mxu0 %v57
    %89 = vmatprep.subr.mxu0 %v56
    %90 = vmatpush1.xpose.msra.mxu0 %v55
    %91 = vmatprep.subr.mxu0 %v54
    %92 = vmatpush1.xpose.msra.mxu0 %v53
    %93 = vmatprep.subr.mxu0 %v52
    %94 = vmatpush1.xpose.msra.mxu0 %v51
    %95 = vmatprep.subr.mxu0 %v50
    %96 = vmatpush1.xpose.msra.mxu0 %v49
    %97 = vmatprep.subr.mxu0 %v48
    %98 = vmatpush1.xpose.msra.mxu0 %v47
    %99 = vmatprep.subr.mxu0 %v46
    %100 = vmatpush1.xpose.msra.mxu0 %v45
    %101 = vmatprep.subr.mxu0 %v44
    %102 = vmatpush1.xpose.msra.mxu0 %v43
    %103 = vmatprep.subr.mxu0 %v42
    %104 = vmatpush1.xpose.msra.mxu0 %v41
    %105 = vmatprep.subr.mxu0 0.0
    %106 = vmatpush2.xpose.msra.mxu0 0.0
    %107 = vmatprep.subr.mxu0 0.0
    %108 = vmatpush2.xpose.msra.mxu0 0.0
    %109 = vmatprep.subr.mxu0 0.0
    %110 = vmatpush2.xpose.msra.mxu0 0.0
    %111 = vmatprep.subr.mxu0 0.0
    %112 = vmatpush2.xpose.msra.mxu0 0.0
    %113 = vmatprep.subr.mxu0 0.0
    %114 = vmatpush2.xpose.msra.mxu0 0.0
    %115 = vmatprep.subr.mxu0 0.0
    %116 = vmatpush2.xpose.msra.mxu0 0.0
    %117 = vmatprep.subr.mxu0 0.0
    %118 = vmatpush2.xpose.msra.mxu0 0.0
    %119 = vmatprep.subr.mxu0 0.0
    %120 = vmatpush2.xpose.msra.mxu0 0.0
    %121 = vmatprep.subr.mxu0 0.0
    %122 = vmatpush2.xpose.msra.mxu0 0.0
    %123 = vmatprep.subr.mxu0 0.0
    %124 = vmatpush2.xpose.msra.mxu0 0.0
    %125 = vmatprep.subr.mxu0 0.0
    %126 = vmatpush2.xpose.msra.mxu0 0.0
    %127 = vmatprep.subr.mxu0 0.0
    %128 = vmatpush2.xpose.msra.mxu0 0.0
    %129 = vmatprep.subr.mxu0 0.0
    %130 = vmatpush2.xpose.msra.mxu0 0.0
    %131 = vmatprep.subr.mxu0 0.0
    %132 = vmatpush2.xpose.msra.mxu0 0.0
    %133 = vmatprep.subr.mxu0 0.0
    %134 = vmatpush2.xpose.msra.mxu0 0.0
    %135 = vmatprep.subr.mxu0 0.0
    %136 = vmatpush2.xpose.msra.mxu0 0.0
    %137 = vmatprep.mubr.f32.mxu0 %v34
    %138 = vmatmul.mubr.f32.gmra.mxu0 %v33
    %v139 = vpop.f32.mrf.mxu0
    %v140 = vadd.f32 0.0, %v139
    %v141 = vpop.f32.mrf.mxu0
    %142 = vmatprep.mubr.f32.mxu0 %v36
    %143 = vmatmul.mubr.f32.gmra.mxu0 %v35
    %v144 = vpop.f32.mrf.mxu0
    %v145 = vadd.f32 0.0, %v144
    %v146 = vpop.f32.mrf.mxu0
    %147 = vdwg.mxu0
    %v148 = vmul.f32 %v140, 20.0
    %v149 = vmul.f32 %v145, 20.0
    %150 = vst [vmem:[#allocation4] sm:$0xff] %v148
    %151 = vst [vmem:[#allocation4 + $0x8] sm:$0xff] %v149
    // Predicated region
    $region10: #{classifier_shallow_forward.1} parent=1 // pred_check
      _
    $region11: #{classifier_shallow_forward.1} parent=1 // pred_check_branch
      %153 = sbr.rel (0) target = $region13
    $region12: #{classifier_shallow_forward.1} parent=1 // pred_region
      %s155 = ssub.s32 512, 512
      %156 = vsyncadd [#allocation3], %s155
      %s157 = sshll.u32 [#allocation2], 4
      %s158 = int_to_ptr.vmem [resolvable:$true] %s157
      %163 = dma.vmem_to_hbm [thread:$0]  %s158, 512, %s2, [#allocation3], 256, 256, 16
    $region13: #{classifier_shallow_forward.1} parent=1 // pred_fallthru
      _
    // Predicated region
    $region14: #{classifier_shallow_forward.1} parent=1 // pred_check
      _
    $region15: #{classifier_shallow_forward.1} parent=1 // pred_check_branch
      %165 = sbr.rel (0) target = $region17
    $region16: #{classifier_shallow_forward.1} parent=1 // pred_region
      %s167 = ssub.s32 256, 256
      %168 = vsyncadd [#allocation5], %s167
      %s169 = sshll.u32 [#allocation4], 4
      %s170 = int_to_ptr.vmem [resolvable:$true] %s169
      %175 = dma.vmem_to_hbm [thread:$0]  %s170, 256, %s3, [#allocation5], 128, 128, 8
    $region17: #{classifier_shallow_forward.1} parent=1 // pred_fallthru
      _
    // Predicated region
    $region18: #{classifier_shallow_forward.1} parent=1 // pred_check
      _
    $region19: #{classifier_shallow_forward.1} parent=1 // pred_check_branch
      %177 = sbr.rel (0) target = $region21
    $region20: #{classifier_shallow_forward.1} parent=1 // pred_region
      %178 = dma.done [#allocation3], 512
    $region21: #{classifier_shallow_forward.1} parent=1 // pred_fallthru
      _
    // Predicated region
    $region22: #{classifier_shallow_forward.1} parent=1 // pred_check
      _
    $region23: #{classifier_shallow_forward.1} parent=1 // pred_check_branch
      %180 = sbr.rel (0) target = $region25
    $region24: #{classifier_shallow_forward.1} parent=1 // pred_region
      %181 = dma.done [#allocation5], 256
    $region25: #{classifier_shallow_forward.1} parent=1 // pred_fallthru
      _
    %182 = vsyncpa [#allocation3], 1
    %183 = vsyncpa [#allocation5], 1

</llo_original>
